<compile_context>
chip_gen: v7x
topology: tpu7x:2x2x1
jax: 0.10.0
libtpu: 0.0.40
codegen_flags: <defaults>
</compile_context>

<pallas_src>
import functools
import math

import jax
import jax.numpy as jnp
from jax.experimental import pallas as pl
from jax.experimental.pallas import tpu as pltpu

_LANES = 128
_SUBLANES = 8


def _bce_smooth_kernel(x_ref, t_ref, part_ref, *, smoothing_eps, num_classes,
                       n_valid, tile_r, needs_mask):
    """One (tile_r, 128) tile: label smoothing + stable BCE-with-logits,
    optional padded-tail masking, collapsed to an (8, 128) lane-dense partial
    sum (VPU-only adds across sublane groups)."""
    x = x_ref[...].astype(jnp.float32)
    t = t_ref[...].astype(jnp.float32)

    # --- label smoothing (exact semantics of _smooth_target) ---
    if smoothing_eps > 0.0:  # static Python branch: eps==0 emits nothing
        t = t * (1.0 - smoothing_eps) + (1.0 - t) * (
            smoothing_eps / (num_classes - 1.0))

    # --- BCEWithLogitsLoss element term (numerically stable) ---
    #   max(x, 0) - x*t + log1p(exp(-|x|))
    per_elem = jnp.maximum(x, 0.0) - x * t + jnp.log1p(jnp.exp(-jnp.abs(x)))

    # --- mask out the flatten/pad tail so it contributes 0 to the sum ---
    if needs_mask:  # static: only emitted when the wrapper actually padded
        i = pl.program_id(0)
        row_ids = jax.lax.broadcasted_iota(jnp.int32, (tile_r, _LANES), 0)
        lane_ids = jax.lax.broadcasted_iota(jnp.int32, (tile_r, _LANES), 1)
        flat_idx = (i * tile_r + row_ids) * _LANES + lane_ids
        per_elem = jnp.where(flat_idx < n_valid, per_elem, 0.0)

    # --- per-tile partial sum: reduce only the leading (tile_r//8) axis ---
    # --- (VPU vreg adds); keep (8, 128) lane-dense for an unmasked vst.  ---
    part_ref[...] = jnp.sum(
        per_elem.reshape(tile_r // _SUBLANES, _SUBLANES, _LANES), axis=0)


def supervised_criterion(output, target, *, smoothing_eps=0.0,
                         is_binary_classification=False, max_tile_rows=2048):
    """Fused label-smoothing + BCEWithLogitsLoss(mean). Returns scalar loss."""
    if not 0.0 <= smoothing_eps <= 1.0:
        raise ValueError(
            f"Expected 0.0 <= smoothing_eps <= 1.0 found {smoothing_eps}")

    # num_classes rule from the PyTorch module (static, resolved at trace time)
    if is_binary_classification or target.ndim <= 2:
        num_classes = 2
    else:
        num_classes = int(target.shape[1])

    n_valid = int(math.prod(output.shape))

    # ---- lane-dense flattened view [rows_padded, 128] ----
    rows_needed = max(1, -(-n_valid // _LANES))
    max_tile_rows = max(_SUBLANES, (int(max_tile_rows) // _SUBLANES) * _SUBLANES)
    tile_r = min(max_tile_rows,
                 ((rows_needed + _SUBLANES - 1) // _SUBLANES) * _SUBLANES)
    rows_padded = ((rows_needed + tile_r - 1) // tile_r) * tile_r
    num_tiles = rows_padded // tile_r

    pad = rows_padded * _LANES - n_valid
    x_flat = jnp.ravel(output)
    t_flat = jnp.ravel(target)
    if pad:
        x_flat = jnp.pad(x_flat, (0, pad))
        t_flat = jnp.pad(t_flat, (0, pad))
    x2 = x_flat.reshape(rows_padded, _LANES)
    t2 = t_flat.reshape(rows_padded, _LANES)

    kernel = functools.partial(
        _bce_smooth_kernel,
        smoothing_eps=float(smoothing_eps),
        num_classes=float(num_classes),
        n_valid=n_valid,
        tile_r=tile_r,
        needs_mask=(pad > 0),
    )

    bytes_accessed = (rows_padded * _LANES
                      * (x2.dtype.itemsize + t2.dtype.itemsize)
                      + num_tiles * _SUBLANES * _LANES * 4)

    partials = pl.pallas_call(
        kernel,
        out_shape=jax.ShapeDtypeStruct((num_tiles * _SUBLANES, _LANES),
                                       jnp.float32),
        grid_spec=pltpu.PrefetchScalarGridSpec(
            num_scalar_prefetch=0,
            grid=(num_tiles,),
            in_specs=[
                pl.BlockSpec((tile_r, _LANES), lambda i: (i, 0)),
                pl.BlockSpec((tile_r, _LANES), lambda i: (i, 0)),
            ],
            out_specs=pl.BlockSpec((_SUBLANES, _LANES), lambda i: (i, 0)),
        ),
        compiler_params=pltpu.CompilerParams(
            dimension_semantics=("parallel",),   # shards across TCs on v7x
            vmem_limit_bytes=32 * 1024 * 1024,
        ),
        cost_estimate=pl.CostEstimate(
            flops=8 * n_valid,
            transcendentals=2 * n_valid,
            bytes_accessed=bytes_accessed,
        ),
    )(x2, t2)

    # tiny final collapse + mean scaling outside the kernel
    return jnp.sum(partials) * (1.0 / n_valid)


if __name__ == "__main__":
    key = jax.random.PRNGKey(0)
    k1, k2, k3, k4 = jax.random.split(key, 4)
    eps = 0.1

    # Case 1: [B, C] classification logits (target.ndim == 2 -> num_classes=2)
    B, C = 8, 4
    logits = jax.random.normal(k1, (B, C), dtype=jnp.float32)
    target = (jax.random.uniform(k2, (B, C)) > 0.5).astype(jnp.float32)
    loss = supervised_criterion(logits, target, smoothing_eps=eps)
    jax.block_until_ready(loss)

    t_s = target * (1.0 - eps) + (1.0 - target) * eps / (2.0 - 1.0)
    l_ref = jnp.mean(jnp.maximum(logits, 0.0) - logits * t_s
                     + jnp.log1p(jnp.exp(-jnp.abs(logits))))
    assert jnp.allclose(loss, l_ref, atol=1e-5, rtol=1e-5), (loss, l_ref)

    # Case 2: [B, C, H, W] (num_classes = C = 3); small max tile forces a
    # multi-tile grid and exercises the padded-tail mask + parallel axis.
    B2, C2, H, W = 2, 3, 16, 16
    logits2 = jax.random.normal(k3, (B2, C2, H, W), dtype=jnp.float32)
    target2 = (jax.random.uniform(k4, (B2, C2, H, W)) > 0.5).astype(jnp.float32)
    loss2 = supervised_criterion(logits2, target2, smoothing_eps=eps,
                                 max_tile_rows=8)
    jax.block_until_ready(loss2)

    t2_s = target2 * (1.0 - eps) + (1.0 - target2) * eps / (3.0 - 1.0)
    l2_ref = jnp.mean(jnp.maximum(logits2, 0.0) - logits2 * t2_s
                      + jnp.log1p(jnp.exp(-jnp.abs(logits2))))
    assert jnp.allclose(loss2, l2_ref, atol=1e-5, rtol=1e-5), (loss2, l2_ref)

    # Case 3: eps == 0 path (static branch emits no smoothing work)
    loss3 = supervised_criterion(logits, target, smoothing_eps=0.0)
    jax.block_until_ready(loss3)
    l3_ref = jnp.mean(jnp.maximum(logits, 0.0) - logits * target
                      + jnp.log1p(jnp.exp(-jnp.abs(logits))))
    assert jnp.allclose(loss3, l3_ref, atol=1e-5, rtol=1e-5), (loss3, l3_ref)

    print("KERNEL_OK")
</pallas_src>

<mosaic_0001>
module attributes {stable_mosaic.version = 11 : i64} {
  func.func @_bce_smooth_kernel(%arg0: i32, %arg1: memref<8x128xf32, #tpu.memory_space<vmem>>, %arg2: memref<8x128xf32, #tpu.memory_space<vmem>>, %arg3: memref<8x128xf32, #tpu.memory_space<vmem>>) attributes {dimension_semantics = [#tpu.dimension_semantics<parallel>], iteration_bounds = array<i64: 1>, scalar_prefetch = 0 : i64, scratch_operands = 0 : i64, tpu.core_type = #tpu.core_type<tc>, window_params = [{transform_indices = @transform_0, window_bounds = array<i64: 8, 128>}, {transform_indices = @transform_1, window_bounds = array<i64: 8, 128>}, {transform_indices = @transform_2, window_bounds = array<i64: 8, 128>}]} {
    %c0 = arith.constant 0 : index
    %c0_0 = arith.constant 0 : index
    %0 = vector.load %arg1[%c0, %c0_0] : memref<8x128xf32, #tpu.memory_space<vmem>>, vector<8x128xf32>
    %c0_1 = arith.constant 0 : index
    %c0_2 = arith.constant 0 : index
    %1 = vector.load %arg2[%c0_1, %c0_2] : memref<8x128xf32, #tpu.memory_space<vmem>>, vector<8x128xf32>
    %cst = arith.constant 0.899999976 : f32
    %2 = vector.broadcast %cst : f32 to vector<8x128xf32>
    %3 = arith.mulf %1, %2 : vector<8x128xf32>
    %cst_3 = arith.constant 1.000000e+00 : f32
    %4 = vector.broadcast %cst_3 : f32 to vector<8x128xf32>
    %5 = arith.subf %4, %1 : vector<8x128xf32>
    %cst_4 = arith.constant 1.000000e-01 : f32
    %6 = vector.broadcast %cst_4 : f32 to vector<8x128xf32>
    %7 = arith.mulf %5, %6 : vector<8x128xf32>
    %8 = arith.addf %3, %7 : vector<8x128xf32>
    %cst_5 = arith.constant 0.000000e+00 : f32
    %9 = vector.broadcast %cst_5 : f32 to vector<8x128xf32>
    %10 = arith.maximumf %0, %9 : vector<8x128xf32>
    %11 = arith.mulf %0, %8 : vector<8x128xf32>
    %12 = arith.subf %10, %11 : vector<8x128xf32>
    %13 = math.absf %0 : vector<8x128xf32>
    %cst_6 = arith.constant 0.000000e+00 : f32
    %14 = vector.broadcast %cst_6 : f32 to vector<8x128xf32>
    %15 = arith.subf %14, %13 : vector<8x128xf32>
    %16 = math.exp %15 : vector<8x128xf32>
    %17 = math.log1p %16 : vector<8x128xf32>
    %18 = arith.addf %12, %17 : vector<8x128xf32>
    %19 = tpu.iota {dimensions = array<i32: 0>} : vector<8x128xi32>
    %20 = tpu.iota {dimensions = array<i32: 1>} : vector<8x128xi32>
    %c8_i32 = arith.constant 8 : i32
    %21 = arith.muli %arg0, %c8_i32 : i32
    %22 = vector.broadcast %21 : i32 to vector<8x128xi32>
    %23 = arith.addi %22, %19 : vector<8x128xi32>
    %c128_i32 = arith.constant 128 : i32
    %24 = vector.broadcast %c128_i32 : i32 to vector<8x128xi32>
    %25 = arith.muli %23, %24 : vector<8x128xi32>
    %26 = arith.addi %25, %20 : vector<8x128xi32>
    %c32_i32 = arith.constant 32 : i32
    %27 = vector.broadcast %c32_i32 : i32 to vector<8x128xi32>
    %28 = arith.cmpi slt, %26, %27 : vector<8x128xi32>
    %cst_7 = arith.constant 0.000000e+00 : f32
    %29 = vector.broadcast %cst_7 : f32 to vector<8x128xf32>
    %30 = arith.select %28, %18, %29 : vector<8x128xi1>, vector<8x128xf32>
    %31 = vector.shape_cast %30 : vector<8x128xf32> to vector<1x8x128xf32>
    %cst_8 = arith.constant dense<0.000000e+00> : vector<8x128xf32>
    %32 = vector.multi_reduction <add>, %31, %cst_8 [0] : vector<1x8x128xf32> to vector<8x128xf32>
    %c0_9 = arith.constant 0 : index
    %c0_10 = arith.constant 0 : index
    %33 = vector.load %arg3[%c0_9, %c0_10] : memref<8x128xf32, #tpu.memory_space<vmem>>, vector<8x128xf32>
    tpu.vector_store %arg3[%c0_9, %c0_10], %32 {strides = array<i32>} : memref<8x128xf32, #tpu.memory_space<vmem>>, vector<8x128xf32>,
    return
  }
  func.func @transform_0(%arg0: i32) -> (i32, i32) {
    %c0_i32 = arith.constant 0 : i32
    %c0_i32_0 = arith.constant 0 : i32
    return %arg0, %c0_i32 : i32, i32
  }
  func.func @transform_1(%arg0: i32) -> (i32, i32) {
    %c0_i32 = arith.constant 0 : i32
    %c0_i32_0 = arith.constant 0 : i32
    return %arg0, %c0_i32 : i32, i32
  }
  func.func @transform_2(%arg0: i32) -> (i32, i32) {
    %c0_i32 = arith.constant 0 : i32
    %c0_i32_0 = arith.constant 0 : i32
    return %arg0, %c0_i32 : i32, i32
  }
}

</mosaic_0001>

<llo_original>
// kernel: tpu_custom_call.1
$region0: #{tpu_custom_call.1}
  #allocation0 [shape = 'u32[]', space=smem, size = 0x4, offset = 0x4, fixed_abs, tag = 'smem constant byte address 0x4 - core index']
  #allocation1 [shape = 'u32[144,128]{1,0:T(1,128)}', space=vmem, size = 0x12000, scoped, tag = 'internal scratch']
  %s0 = inlined_call_operand.hbm [shape: f32[8,128], index: 0, kind: input, shape index: {}]
  %s1 = inlined_call_operand.hbm [shape: f32[8,128], index: 1, kind: input, shape index: {}]
  %s2 = inlined_call_operand.hbm [shape: f32[8,128], index: 2, kind: output, shape index: {}]
  %s3 = sld [smem:[#allocation0]]
  $region26: #{tpu_custom_call.1} parent=0
    _
  %s5 = ssub.s32 1, %s3
  %s6 = scalar_select 0, %s5, %s3
  $region1: #{tpu_custom_call.1} parent=0
    #allocation2 [shape = 'u8[4096]{0}', space=vmem, size = 0x1000, scoped, tag = 'input window, operand 0, single buffered']
    #allocation3 [shape = 's32[1]{0}', space=sflag, size = 0x4, scoped, tag = 'scoped memory for tpu_custom_call.1']
    #allocation4 [shape = 's32[1]{0}', space=sflag, size = 0x4, scoped, tag = 'scoped memory for tpu_custom_call.1']
    #allocation5 [shape = 'u8[4096]{0}', space=vmem, size = 0x1000, scoped, tag = 'input window, operand 1, single buffered']
    #allocation6 [shape = 's32[1]{0}', space=sflag, size = 0x4, scoped, tag = 'scoped memory for tpu_custom_call.1']
    #allocation7 [shape = 'u8[4096]{0}', space=vmem, size = 0x1000, scoped, tag = 'output window, operand 0, single buffered']
    %7 = vsyncpa [#allocation3], 0
    %8 = vsyncpa [#allocation6], 0
    %9 = vsyncpa [#allocation4], 0
    // Predicated region
    $region2: #{tpu_custom_call.1} parent=1 // pred_check
      _
    $region3: #{tpu_custom_call.1} parent=1 // pred_check_branch
      %11 = sbr.rel (0) target = $region5
    $region4: #{tpu_custom_call.1} parent=1 // pred_region
      %s13 = ssub.s32 128, 128
      %14 = vsyncadd [#allocation3], %s13
      %s16 = sshll.u32 [#allocation2], 4
      %s17 = int_to_ptr.vmem [resolvable:$true] %s16
      %19 = dma.hbm_to_vmem [thread:$0]  %s0, 128, %s17, [#allocation3]
    $region5: #{tpu_custom_call.1} parent=1 // pred_fallthru
      _
    // Predicated region
    $region6: #{tpu_custom_call.1} parent=1 // pred_check
      _
    $region7: #{tpu_custom_call.1} parent=1 // pred_check_branch
      %21 = sbr.rel (0) target = $region9
    $region8: #{tpu_custom_call.1} parent=1 // pred_region
      %s23 = ssub.s32 128, 128
      %24 = vsyncadd [#allocation6], %s23
      %s26 = sshll.u32 [#allocation5], 4
      %s27 = int_to_ptr.vmem [resolvable:$true] %s26
      %29 = dma.hbm_to_vmem [thread:$0]  %s1, 128, %s27, [#allocation6]
    $region9: #{tpu_custom_call.1} parent=1 // pred_fallthru
      _
    // Predicated region
    $region10: #{tpu_custom_call.1} parent=1 // pred_check
      _
    $region11: #{tpu_custom_call.1} parent=1 // pred_check_branch
      %31 = sbr.rel (0) target = $region13
    $region12: #{tpu_custom_call.1} parent=1 // pred_region
      %32 = dma.done [#allocation3], 128
    $region13: #{tpu_custom_call.1} parent=1 // pred_fallthru
      _
    // Predicated region
    $region14: #{tpu_custom_call.1} parent=1 // pred_check
      _
    $region15: #{tpu_custom_call.1} parent=1 // pred_check_branch
      %34 = sbr.rel (0) target = $region17
    $region16: #{tpu_custom_call.1} parent=1 // pred_region
      %35 = dma.done [#allocation6], 128
    $region17: #{tpu_custom_call.1} parent=1 // pred_fallthru
      _
    %v36 = vld [vmem:[#allocation2] sm:$0xff]
    %v37 = vld [vmem:[#allocation5] sm:$0xff]
    %v38 = vmul.f32 %v37, 0.9
    %v39 = vsub.f32 1.0, %v37
    %v40 = vmul.f32 %v39, 0.1
    %v41 = vadd.f32 %v38, %v40
    %v42 = vmax.f32 %v36, 0.0
    %v43 = vmul.f32 %v36, %v41
    %v44 = vsub.f32 %v42, %v43
    %v45 = vand.u32 2147483647, %v36
    %v46 = vsub.f32 0.0, %v45
    %v47 = vmul.f32 %v46, 1.442695
    %v48 = vpow.pop %v47
    %v49 = vadd.f32 %v48, 1.0
    %v50 = vlog2.pop %v49
    %v51 = vmul.f32 %v50, 0.6931472
    %v52 = vmul.f32 -0.5, %v48
    %v53 = vadd.f32 %v52, 1.0
    %v54 = vmul.f32 %v53, %v48
    %v55 = vand.u32 2147483647, %v48
    %vm56 = vcmp.lt.f32.partialorder %v55, 0.0004427343
    %v57 = vsel %vm56, %v54, %v51
    %v58 = vadd.f32 %v44, %v57
    %v59 = vlaneseq
    %v60 = vshrl.u32 %v59, 7
    %v61 = vlaneseq
    %v62 = vand.u32 %v61, 127
    %s63 = smul.u32 0, 8
    %v64 = vstv %s63
    %v65 = vadd.s32 %v64, %v60
    %v66 = vmul.u32 %v65, 128
    %v67 = vadd.s32 %v66, %v62
    %vm68 = vcmp.lt.s32.totalorder %v67, 32
    %v69 = vsel %vm68, %v58, 0.0
    %v70 = vadd.f32 %v69, 0.0
    %71 = vst [vmem:[#allocation7] sm:$0xff] %v70
    // Predicated region
    $region18: #{tpu_custom_call.1} parent=1 // pred_check
      _
    $region19: #{tpu_custom_call.1} parent=1 // pred_check_branch
      %73 = sbr.rel (0) target = $region21
    $region20: #{tpu_custom_call.1} parent=1 // pred_region
      %s75 = ssub.s32 128, 128
      %76 = vsyncadd [#allocation4], %s75
      %s78 = sshll.u32 [#allocation7], 4
      %s79 = int_to_ptr.vmem [resolvable:$true] %s78
      %81 = dma.vmem_to_hbm [thread:$0]  %s79, 128, %s2, [#allocation4]
    $region21: #{tpu_custom_call.1} parent=1 // pred_fallthru
      _
    // Predicated region
    $region22: #{tpu_custom_call.1} parent=1 // pred_check
      _
    $region23: #{tpu_custom_call.1} parent=1 // pred_check_branch
      %83 = sbr.rel (0) target = $region25
    $region24: #{tpu_custom_call.1} parent=1 // pred_region
      %84 = dma.done [#allocation4], 128
    $region25: #{tpu_custom_call.1} parent=1 // pred_fallthru
      _
    %85 = vsyncpa [#allocation3], 1
    %86 = vsyncpa [#allocation6], 1
    %87 = vsyncpa [#allocation4], 1

</llo_original>
